<compile_context>
chip_gen: v5e
topology: v5e:2x2
jax: 0.10.0
libtpu: 0.0.40
codegen_flags: <defaults>
</compile_context>

<pallas_src>
import functools

import jax
import jax.numpy as jnp
from jax import lax
from jax.experimental import pallas as pl
from jax.experimental.pallas import tpu as pltpu

_LANES = 128
_SUBLANES = 8  # f32 accumulator sublane tile


def _algebraic_loss_kernel(y_ref, yp_ref, o_ref, *, n_rows, row_tile,
                           tiles_per_core, any_mask):
    c = pl.program_id(0)   # core shard (size 1 except on dual-TC chips)
    j = pl.program_id(1)   # sequential reduction over row tiles

    @pl.when(j == 0)
    def _():
        o_ref[...] = jnp.zeros_like(o_ref)

    # Inputs stay in their native (possibly narrow) dtype over the DMA path;
    # cast to f32 on the VPU.
    e = y_ref[...].astype(jnp.float32) - yp_ref[...].astype(jnp.float32)
    e2 = e * e
    # e^2 / sqrt(1 + e^2) == e^2 * rsqrt(1 + e^2): one EUP op + one VPU mul.
    term = e2 * lax.rsqrt(1.0 + e2)

    def _accumulate(t):
        # Fold the (row_tile, 128) block into one (8, 128) vreg of partial
        # sums.  The reshape keeps the minor (8, 128) tile intact, so this
        # lowers to stacked-vreg VPU adds (no XLU reduce / relayout), and the
        # result accumulates into the resident lane-dense output block.
        o_ref[...] += jnp.sum(t.reshape(-1, _SUBLANES, _LANES), axis=0)

    if any_mask:  # static: only emitted when some logical tile is ragged
        tile_idx = c * tiles_per_core + j
        is_full = (tile_idx + 1) * row_tile <= n_rows

        @pl.when(is_full)
        def _():
            _accumulate(term)  # fast path: every row valid, no mask work

        @pl.when(jnp.logical_not(is_full))
        def _():
            # Boundary / clamped-overflow tile: zero rows past n_rows.  Keep
            # this a select (jnp.where), not a multiply-by-mask, so garbage
            # (possibly NaN/Inf) padding rows of a partial block never
            # propagate into the sum.
            local_row = lax.broadcasted_iota(jnp.int32, term.shape, 0)
            global_row = tile_idx * row_tile + local_row
            _accumulate(jnp.where(global_row < n_rows, term, 0.0))
    else:
        _accumulate(term)


def _chip_config():
    """Pick (n_cores, target DMA block bytes per input) from the local TPU."""
    kind = ""
    try:
        kind = jax.devices()[0].device_kind.lower()
    except Exception:  # no accelerator info -> conservative defaults
        pass
    if "7" in kind:                              # v7x: 2 TCs, 3.2 TB/s, 64 MiB VMEM
        return 2, 4 << 20
    if "v6" in kind:                             # v6e: 1 TC, ~1.4 TB/s
        return 1, 4 << 20
    if "v5e" in kind or "v5 lite" in kind:       # v5e: 16 MiB scoped-VMEM default
        return 1, 2 << 20
    return 1, 2 << 20                            # unknown / older: conservative


def _partial_sums(y2d, yp2d, *, n_rows, row_tile, n_cores, core_parallel,
                  itemsize, n_elems):
    n_tiles = pl.cdiv(n_rows, row_tile)
    n_cores = max(1, min(n_cores, n_tiles))
    tiles_per_core = pl.cdiv(n_tiles, n_cores)
    any_mask = (n_cores * tiles_per_core * row_tile) != n_rows

    def in_index_map(c, j):
        # Clamp so a core's trailing (empty) logical tiles re-read a valid
        # block; the in-kernel row mask zeroes their contribution.
        return (jnp.minimum(c * tiles_per_core + j, n_tiles - 1), 0)

    kernel = functools.partial(
        _algebraic_loss_kernel,
        n_rows=n_rows,
        row_tile=row_tile,
        tiles_per_core=tiles_per_core,
        any_mask=any_mask,
    )

    block_bytes = row_tile * _LANES * itemsize
    # 2 inputs x 2 pipeline buffers + output/accumulator + headroom.
    vmem_limit = min(4 * block_bytes + (2 << 20), 32 << 20)

    if core_parallel and n_cores > 1:
        dim_sems = (pltpu.CORE_PARALLEL, pltpu.ARBITRARY)
    else:
        dim_sems = (pltpu.ARBITRARY, pltpu.ARBITRARY)

    cost = pl.CostEstimate(
        flops=5 * n_elems,
        transcendentals=n_elems,
        bytes_accessed=2 * n_elems * itemsize + n_cores * _SUBLANES * _LANES * 4,
    )

    return pl.pallas_call(
        kernel,
        out_shape=jax.ShapeDtypeStruct((n_cores, _SUBLANES, _LANES), jnp.float32),
        grid_spec=pltpu.PrefetchScalarGridSpec(
            num_scalar_prefetch=0,
            grid=(n_cores, tiles_per_core),
            in_specs=[
                pl.BlockSpec((row_tile, _LANES), in_index_map),
                pl.BlockSpec((row_tile, _LANES), in_index_map),
            ],
            out_specs=pl.BlockSpec(
                (None, _SUBLANES, _LANES), lambda c, j: (c, 0, 0)
            ),
        ),
        compiler_params=pltpu.CompilerParams(
            dimension_semantics=dim_sems,
            vmem_limit_bytes=vmem_limit,
        ),
        cost_estimate=cost,
    )(y2d, yp2d)


def algebraic_loss(y_t, y_prime_t, *, row_tile=None, n_cores=None):
    assert y_t.shape == y_prime_t.shape, "inputs must have matching shapes"
    n_elems = y_t.size
    itemsize = jnp.dtype(y_t.dtype).itemsize
    # Packed sublane tile for the input dtype: 8 (f32), 16 (bf16/f16), 32 (8-bit).
    min_rows = max(_SUBLANES, 32 // max(1, itemsize))

    auto_cores, block_bytes = _chip_config()
    if n_cores is None:
        n_cores = auto_cores
    if row_tile is None:
        # Keep the per-input DMA block at ~block_bytes regardless of dtype.
        row_tile = (block_bytes // (_LANES * itemsize)) // min_rows * min_rows
        row_tile = max(min_rows, row_tile)

    # Flatten into a lane-dense (rows, 128) view; no dtype cast.  Only when
    # n % 128 != 0 do we zero-pad (and only up to the next lane multiple) —
    # zero padding contributes exactly 0 to the sum.
    flat_y = jnp.ravel(y_t)
    flat_yp = jnp.ravel(y_prime_t)
    rem = n_elems % _LANES
    if rem:
        flat_y = jnp.pad(flat_y, (0, _LANES - rem))
        flat_yp = jnp.pad(flat_yp, (0, _LANES - rem))
    n_rows = flat_y.size // _LANES
    y2d = flat_y.reshape(n_rows, _LANES)
    yp2d = flat_yp.reshape(n_rows, _LANES)

    # Clamp the tile for small inputs, preserving the dtype's sublane tiling.
    row_tile = min(row_tile, pl.cdiv(n_rows, min_rows) * min_rows)
    row_tile = max(min_rows, row_tile)

    run = functools.partial(
        _partial_sums, y2d, yp2d,
        n_rows=n_rows, row_tile=row_tile, itemsize=itemsize, n_elems=n_elems)
    try:
        partials = run(n_cores=n_cores, core_parallel=True)
    except Exception:
        # Conservative fallback (e.g. CORE_PARALLEL rejected on this chip).
        partials = run(n_cores=1, core_parallel=False)

    # Final cross-lane reduction + mean in plain JAX (tiny: n_cores*8*128 f32).
    return jnp.sum(partials) / jnp.float32(n_elems)


def _reference(y_t, y_prime_t):
    e = y_t.astype(jnp.float32) - y_prime_t.astype(jnp.float32)
    e2 = e * e
    return jnp.mean(e2 / jnp.sqrt(1.0 + e2))


if __name__ == "__main__":
    key = jax.random.PRNGKey(0)
    k1, k2, k3, k4 = jax.random.split(key, 4)

    # Small NCHW-like regression target.
    shape = (2, 4, 16, 16)
    y_t = jax.random.normal(k1, shape, dtype=jnp.float32)
    y_prime_t = jax.random.normal(k2, shape, dtype=jnp.float32)
    loss = jax.block_until_ready(algebraic_loss(y_t, y_prime_t))
    ref = _reference(y_t, y_prime_t)
    assert jnp.allclose(loss, ref, rtol=1e-5, atol=1e-6), (loss, ref)

    # Ragged element count: exercises the lane pad + boundary-tile mask path.
    y_r = jax.random.normal(k3, (3, 5, 7), dtype=jnp.float32)
    yp_r = jax.random.normal(k4, (3, 5, 7), dtype=jnp.float32)
    loss_r = jax.block_until_ready(algebraic_loss(y_r, yp_r))
    ref_r = _reference(y_r, yp_r)
    assert jnp.allclose(loss_r, ref_r, rtol=1e-5, atol=1e-6), (loss_r, ref_r)

    # bf16 inputs: exercises the dtype-aware (16, 128) tile clamp.
    y_b = jax.random.normal(k1, (2, 3, 16, 16), dtype=jnp.bfloat16)
    yp_b = jax.random.normal(k2, (2, 3, 16, 16), dtype=jnp.bfloat16)
    loss_b = jax.block_until_ready(algebraic_loss(y_b, yp_b))
    ref_b = _reference(y_b, yp_b)
    assert jnp.allclose(loss_b, ref_b, rtol=1e-5, atol=1e-6), (loss_b, ref_b)

    print("KERNEL_OK")
</pallas_src>

<mosaic_0001>
module attributes {stable_mosaic.version = 11 : i64} {
  func.func @_algebraic_loss_kernel(%arg0: i32, %arg1: i32, %arg2: memref<16x128xf32, #tpu.memory_space<vmem>>, %arg3: memref<16x128xf32, #tpu.memory_space<vmem>>, %arg4: memref<1x8x128xf32, #tpu.memory_space<vmem>>) attributes {dimension_semantics = [#tpu.dimension_semantics<arbitrary>, #tpu.dimension_semantics<arbitrary>], iteration_bounds = array<i64: 1, 1>, scalar_prefetch = 0 : i64, scratch_operands = 0 : i64, tpu.core_type = #tpu.core_type<tc>, window_params = [{transform_indices = @transform_0, window_bounds = array<i64: 16, 128>}, {transform_indices = @transform_1, window_bounds = array<i64: 16, 128>}, {transform_indices = @transform_2, window_bounds = array<i64: 1, 8, 128>}]} {
    %c0_i32 = arith.constant 0 : i32
    %0 = arith.cmpi eq, %arg1, %c0_i32 : i32
    %1 = arith.extui %0 : i1 to i32
    %c0_i32_0 = arith.constant 0 : i32
    %2 = arith.cmpi ne, %1, %c0_i32_0 : i32
    scf.if %2 {
      %cst_11 = arith.constant 0.000000e+00 : f32
      %19 = vector.broadcast %cst_11 : f32 to vector<8x128xf32>
      %c0_12 = arith.constant 0 : index
      %c0_13 = arith.constant 0 : index
      %c0_14 = arith.constant 0 : index
      %20 = vector.load %arg4[%c0_12, %c0_13, %c0_14] : memref<1x8x128xf32, #tpu.memory_space<vmem>>, vector<1x8x128xf32>
      %21 = vector.shape_cast %20 : vector<1x8x128xf32> to vector<8x128xf32>
      %22 = vector.shape_cast %19 : vector<8x128xf32> to vector<1x8x128xf32>
      tpu.vector_store %arg4[%c0_12, %c0_13, %c0_14], %22 {strides = array<i32>} : memref<1x8x128xf32, #tpu.memory_space<vmem>>, vector<1x8x128xf32>,
    } else {
    }
    %c0 = arith.constant 0 : index
    %c0_1 = arith.constant 0 : index
    %3 = vector.load %arg2[%c0, %c0_1] : memref<16x128xf32, #tpu.memory_space<vmem>>, vector<16x128xf32>
    %c0_2 = arith.constant 0 : index
    %c0_3 = arith.constant 0 : index
    %4 = vector.load %arg3[%c0_2, %c0_3] : memref<16x128xf32, #tpu.memory_space<vmem>>, vector<16x128xf32>
    %5 = arith.subf %3, %4 : vector<16x128xf32>
    %6 = arith.mulf %5, %5 : vector<16x128xf32>
    %cst = arith.constant 1.000000e+00 : f32
    %7 = vector.broadcast %cst : f32 to vector<16x128xf32>
    %8 = arith.addf %7, %6 : vector<16x128xf32>
    %9 = math.rsqrt %8 : vector<16x128xf32>
    %10 = arith.mulf %6, %9 : vector<16x128xf32>
    %c0_4 = arith.constant 0 : index
    %c0_5 = arith.constant 0 : index
    %c0_6 = arith.constant 0 : index
    %11 = vector.load %arg4[%c0_4, %c0_5, %c0_6] : memref<1x8x128xf32, #tpu.memory_space<vmem>>, vector<1x8x128xf32>
    %12 = vector.shape_cast %11 : vector<1x8x128xf32> to vector<8x128xf32>
    %13 = vector.shape_cast %10 : vector<16x128xf32> to vector<2x8x128xf32>
    %cst_7 = arith.constant dense<0.000000e+00> : vector<8x128xf32>
    %14 = vector.multi_reduction <add>, %13, %cst_7 [0] : vector<2x8x128xf32> to vector<8x128xf32>
    %15 = arith.addf %12, %14 : vector<8x128xf32>
    %c0_8 = arith.constant 0 : index
    %c0_9 = arith.constant 0 : index
    %c0_10 = arith.constant 0 : index
    %16 = vector.load %arg4[%c0_8, %c0_9, %c0_10] : memref<1x8x128xf32, #tpu.memory_space<vmem>>, vector<1x8x128xf32>
    %17 = vector.shape_cast %16 : vector<1x8x128xf32> to vector<8x128xf32>
    %18 = vector.shape_cast %15 : vector<8x128xf32> to vector<1x8x128xf32>
    tpu.vector_store %arg4[%c0_8, %c0_9, %c0_10], %18 {strides = array<i32>} : memref<1x8x128xf32, #tpu.memory_space<vmem>>, vector<1x8x128xf32>,
    return
  }
  func.func @transform_0(%arg0: i32, %arg1: i32) -> (i32, i32) {
    %c1_i32 = arith.constant 1 : i32
    %0 = arith.muli %arg0, %c1_i32 : i32
    %1 = arith.addi %0, %arg1 : i32
    %c0_i32 = arith.constant 0 : i32
    %2 = arith.minsi %1, %c0_i32 : i32
    %c0_i32_0 = arith.constant 0 : i32
    %c0_i32_1 = arith.constant 0 : i32
    return %2, %c0_i32_0 : i32, i32
  }
  func.func @transform_1(%arg0: i32, %arg1: i32) -> (i32, i32) {
    %c1_i32 = arith.constant 1 : i32
    %0 = arith.muli %arg0, %c1_i32 : i32
    %1 = arith.addi %0, %arg1 : i32
    %c0_i32 = arith.constant 0 : i32
    %2 = arith.minsi %1, %c0_i32 : i32
    %c0_i32_0 = arith.constant 0 : i32
    %c0_i32_1 = arith.constant 0 : i32
    return %2, %c0_i32_0 : i32, i32
  }
  func.func @transform_2(%arg0: i32, %arg1: i32) -> (i32, i32, i32) {
    %c0_i32 = arith.constant 0 : i32
    %c0_i32_0 = arith.constant 0 : i32
    %c0_i32_1 = arith.constant 0 : i32
    return %arg0, %c0_i32, %c0_i32_0 : i32, i32, i32
  }
}

module attributes {stable_mosaic.version = 11 : i64} {
  func.func @_algebraic_loss_kernel(%arg0: i32, %arg1: i32, %arg2: memref<16x128xf32, #tpu.memory_space<vmem>>, %arg3: memref<16x128xf32, #tpu.memory_space<vmem>>, %arg4: memref<1x8x128xf32, #tpu.memory_space<vmem>>) attributes {dimension_semantics = [#tpu.dimension_semantics<arbitrary>, #tpu.dimension_semantics<arbitrary>], iteration_bounds = array<i64: 1, 1>, scalar_prefetch = 0 : i64, scratch_operands = 0 : i64, tpu.core_type = #tpu.core_type<tc>, window_params = [{transform_indices = @transform_0, window_bounds = array<i64: 16, 128>}, {transform_indices = @transform_1, window_bounds = array<i64: 16, 128>}, {transform_indices = @transform_2, window_bounds = array<i64: 1, 8, 128>}]} {
    %c0_i32 = arith.constant 0 : i32
    %0 = arith.cmpi eq, %arg1, %c0_i32 : i32
    %1 = arith.extui %0 : i1 to i32
    %c0_i32_0 = arith.constant 0 : i32
    %2 = arith.cmpi ne, %1, %c0_i32_0 : i32
    scf.if %2 {
      %cst_11 = arith.constant 0.000000e+00 : f32
      %19 = vector.broadcast %cst_11 : f32 to vector<8x128xf32>
      %c0_12 = arith.constant 0 : index
      %c0_13 = arith.constant 0 : index
      %c0_14 = arith.constant 0 : index
      %20 = vector.load %arg4[%c0_12, %c0_13, %c0_14] : memref<1x8x128xf32, #tpu.memory_space<vmem>>, vector<1x8x128xf32>
      %21 = vector.shape_cast %20 : vector<1x8x128xf32> to vector<8x128xf32>
      %22 = vector.shape_cast %19 : vector<8x128xf32> to vector<1x8x128xf32>
      tpu.vector_store %arg4[%c0_12, %c0_13, %c0_14], %22 {strides = array<i32>} : memref<1x8x128xf32, #tpu.memory_space<vmem>>, vector<1x8x128xf32>,
    } else {
    }
    %c0 = arith.constant 0 : index
    %c0_1 = arith.constant 0 : index
    %3 = vector.load %arg2[%c0, %c0_1] : memref<16x128xf32, #tpu.memory_space<vmem>>, vector<16x128xf32>
    %c0_2 = arith.constant 0 : index
    %c0_3 = arith.constant 0 : index
    %4 = vector.load %arg3[%c0_2, %c0_3] : memref<16x128xf32, #tpu.memory_space<vmem>>, vector<16x128xf32>
    %5 = arith.subf %3, %4 : vector<16x128xf32>
    %6 = arith.mulf %5, %5 : vector<16x128xf32>
    %cst = arith.constant 1.000000e+00 : f32
    %7 = vector.broadcast %cst : f32 to vector<16x128xf32>
    %8 = arith.addf %7, %6 : vector<16x128xf32>
    %9 = math.rsqrt %8 : vector<16x128xf32>
    %10 = arith.mulf %6, %9 : vector<16x128xf32>
    %c0_4 = arith.constant 0 : index
    %c0_5 = arith.constant 0 : index
    %c0_6 = arith.constant 0 : index
    %11 = vector.load %arg4[%c0_4, %c0_5, %c0_6] : memref<1x8x128xf32, #tpu.memory_space<vmem>>, vector<1x8x128xf32>
    %12 = vector.shape_cast %11 : vector<1x8x128xf32> to vector<8x128xf32>
    %13 = vector.shape_cast %10 : vector<16x128xf32> to vector<2x8x128xf32>
    %cst_7 = arith.constant dense<0.000000e+00> : vector<8x128xf32>
    %14 = vector.multi_reduction <add>, %13, %cst_7 [0] : vector<2x8x128xf32> to vector<8x128xf32>
    %15 = arith.addf %12, %14 : vector<8x128xf32>
    %c0_8 = arith.constant 0 : index
    %c0_9 = arith.constant 0 : index
    %c0_10 = arith.constant 0 : index
    %16 = vector.load %arg4[%c0_8, %c0_9, %c0_10] : memref<1x8x128xf32, #tpu.memory_space<vmem>>, vector<1x8x128xf32>
    %17 = vector.shape_cast %16 : vector<1x8x128xf32> to vector<8x128xf32>
    %18 = vector.shape_cast %15 : vector<8x128xf32> to vector<1x8x128xf32>
    tpu.vector_store %arg4[%c0_8, %c0_9, %c0_10], %18 {strides = array<i32>} : memref<1x8x128xf32, #tpu.memory_space<vmem>>, vector<1x8x128xf32>,
    return
  }
  func.func @transform_0(%arg0: i32, %arg1: i32) -> (i32, i32) {
    %c1_i32 = arith.constant 1 : i32
    %0 = arith.muli %arg0, %c1_i32 : i32
    %1 = arith.addi %0, %arg1 : i32
    %c0_i32 = arith.constant 0 : i32
    %2 = arith.minsi %1, %c0_i32 : i32
    %c0_i32_0 = arith.constant 0 : i32
    %c0_i32_1 = arith.constant 0 : i32
    return %2, %c0_i32_0 : i32, i32
  }
  func.func @transform_1(%arg0: i32, %arg1: i32) -> (i32, i32) {
    %c1_i32 = arith.constant 1 : i32
    %0 = arith.muli %arg0, %c1_i32 : i32
    %1 = arith.addi %0, %arg1 : i32
    %c0_i32 = arith.constant 0 : i32
    %2 = arith.minsi %1, %c0_i32 : i32
    %c0_i32_0 = arith.constant 0 : i32
    %c0_i32_1 = arith.constant 0 : i32
    return %2, %c0_i32_0 : i32, i32
  }
  func.func @transform_2(%arg0: i32, %arg1: i32) -> (i32, i32, i32) {
    %c0_i32 = arith.constant 0 : i32
    %c0_i32_0 = arith.constant 0 : i32
    %c0_i32_1 = arith.constant 0 : i32
    return %arg0, %c0_i32, %c0_i32_0 : i32, i32, i32
  }
}

</mosaic_0001>

<llo_original>
// kernel: tpu_custom_call.1
$region0: #{tpu_custom_call.1}
  #allocation0 [shape = 'u32[]', space=smem, size = 0x4, offset = 0x4, fixed_abs, tag = 'smem constant byte address 0x4 - core index']
  #allocation1 [shape = 'u32[72,128]{1,0:T(1,128)}', space=vmem, size = 0x9000, scoped, tag = 'internal scratch']
  %s0 = inlined_call_operand.hbm [shape: f32[16,128], index: 0, kind: input, shape index: {}]
  %s1 = inlined_call_operand.hbm [shape: f32[16,128], index: 1, kind: input, shape index: {}]
  %s2 = inlined_call_operand.hbm [shape: f32[1,8,128], index: 2, kind: output, shape index: {}]
  %s3 = sld [smem:[#allocation0]]
  $region30: #{tpu_custom_call.1} parent=0
    _
  %s5 = ssub.s32 1, %s3
  %s6 = scalar_select 0, %s5, %s3
  $region1: #{tpu_custom_call.1} parent=0
    #allocation2 [shape = 'u8[8192]{0}', space=vmem, size = 0x2000, scoped, tag = 'input window, operand 0, single buffered']
    #allocation3 [shape = 's32[1]{0}', space=sflag, size = 0x4, scoped, tag = 'scoped memory for tpu_custom_call.1']
    #allocation4 [shape = 's32[1]{0}', space=sflag, size = 0x4, scoped, tag = 'scoped memory for tpu_custom_call.1']
    #allocation5 [shape = 'u8[8192]{0}', space=vmem, size = 0x2000, scoped, tag = 'input window, operand 1, single buffered']
    #allocation6 [shape = 's32[1]{0}', space=sflag, size = 0x4, scoped, tag = 'scoped memory for tpu_custom_call.1']
    #allocation7 [shape = 'u8[4096]{0}', space=vmem, size = 0x1000, scoped, tag = 'output window, operand 0, single buffered']
    %7 = vsyncpa [#allocation3], 0
    %8 = vsyncpa [#allocation6], 0
    %9 = vsyncpa [#allocation4], 0
    // Predicated region
    $region2: #{tpu_custom_call.1} parent=1 // pred_check
      _
    $region3: #{tpu_custom_call.1} parent=1 // pred_check_branch
      %11 = sbr.rel (0) target = $region5
    $region4: #{tpu_custom_call.1} parent=1 // pred_region
      %s12 = sadd.s32 0, 0
      %p13 = scmp.lt.s32.totalorder %s12, 0
      %s14 = scalar_select %p13, %s12, 0
      %s15 = smul.u32 2, %s14
      %17 = vsyncadd [#allocation3], 0
      %s18 = smul.addr %s15, 8
      %s19 = scalar_lea.hbm %s0, %s18
      %s20 = sshll.u32 %s19, 4
      %s21 = int_to_ptr.hbm [resolvable:$true] %s20
      %s22 = sshll.u32 [#allocation2], 4
      %s23 = int_to_ptr.vmem [resolvable:$true] %s22
      %28 = dma.hbm_to_vmem [thread:$0]  %s21, 256, %s23, [#allocation3], 128, 128, 8
    $region5: #{tpu_custom_call.1} parent=1 // pred_fallthru
      _
    // Predicated region
    $region6: #{tpu_custom_call.1} parent=1 // pred_check
      _
    $region7: #{tpu_custom_call.1} parent=1 // pred_check_branch
      %30 = sbr.rel (0) target = $region9
    $region8: #{tpu_custom_call.1} parent=1 // pred_region
      %s31 = sadd.s32 0, 0
      %p32 = scmp.lt.s32.totalorder %s31, 0
      %s33 = scalar_select %p32, %s31, 0
      %s34 = smul.u32 2, %s33
      %36 = vsyncadd [#allocation6], 0
      %s37 = smul.addr %s34, 8
      %s38 = scalar_lea.hbm %s1, %s37
      %s39 = sshll.u32 %s38, 4
      %s40 = int_to_ptr.hbm [resolvable:$true] %s39
      %s41 = sshll.u32 [#allocation5], 4
      %s42 = int_to_ptr.vmem [resolvable:$true] %s41
      %47 = dma.hbm_to_vmem [thread:$0]  %s40, 256, %s42, [#allocation6], 128, 128, 8
    $region9: #{tpu_custom_call.1} parent=1 // pred_fallthru
      _
    // Predicated region
    $region10: #{tpu_custom_call.1} parent=1 // pred_check
      _
    $region11: #{tpu_custom_call.1} parent=1 // pred_check_branch
      %49 = sbr.rel (0) target = $region13
    $region12: #{tpu_custom_call.1} parent=1 // pred_region
      %51 = dma.done [#allocation3], 256
    $region13: #{tpu_custom_call.1} parent=1 // pred_fallthru
      _
    // Predicated region
    $region14: #{tpu_custom_call.1} parent=1 // pred_check
      _
    $region15: #{tpu_custom_call.1} parent=1 // pred_check_branch
      %53 = sbr.rel (0) target = $region17
    $region16: #{tpu_custom_call.1} parent=1 // pred_region
      %55 = dma.done [#allocation6], 256
    $region17: #{tpu_custom_call.1} parent=1 // pred_fallthru
      _
    %s56 = sadd.s32 0, 0
    %p57 = scmp.lt.s32.totalorder %s56, 0
    %s58 = scalar_select %p57, %s56, 0
    %s59 = smul.u32 2, %s58
    %s60 = sadd.s32 0, 0
    %p61 = scmp.lt.s32.totalorder %s60, 0
    %s62 = scalar_select %p61, %s60, 0
    %s63 = smul.u32 2, %s62
    %p64 = scmp.eq.s32.totalorder 0, 0
    // Predicated region
    $region18: #{tpu_custom_call.1} parent=1 // pred_check
      %p65 = pneg %p64
    $region19: #{tpu_custom_call.1} parent=1 // pred_check_branch
      %67 = sbr.rel (%p65) target = $region21
    $region20: #{tpu_custom_call.1} parent=1 // pred_region
      %68 = vst [vmem:[#allocation7] sm:$0xff] 0.0
    $region21: #{tpu_custom_call.1} parent=1 // pred_fallthru
      _
    %v69 = vld [vmem:[#allocation2] sm:$0xff]
    %v70 = vld [vmem:[#allocation2 + $0x8] sm:$0xff]
    %v71 = vld [vmem:[#allocation5] sm:$0xff]
    %v72 = vld [vmem:[#allocation5 + $0x8] sm:$0xff]
    %v73 = vsub.f32 %v69, %v71
    %v74 = vsub.f32 %v70, %v72
    %v75 = vmul.f32 %v73, %v73
    %v76 = vmul.f32 %v74, %v74
    %v77 = vadd.f32 %v75, 1.0
    %v78 = vadd.f32 %v76, 1.0
    %v79 = vrsqrt.pop %v77
    %v80 = vmul.f32 %v79, %v77
    %v81 = vmul.f32 %v80, %v79
    %v82 = vmul.f32 0.5, %v81
    %v83 = vsub.f32 1.5, %v82
    %v84 = vmul.f32 %v79, %v83
    %vm85 = vweird.f32 %v77
    %vm86 = vweird.f32 %v79
    %vm87 = vmor %vm85, %vm86
    %v88 = vsel %vm87, %v79, %v84
    %v89 = vrsqrt.pop %v78
    %v90 = vmul.f32 %v89, %v78
    %v91 = vmul.f32 %v90, %v89
    %v92 = vmul.f32 0.5, %v91
    %v93 = vsub.f32 1.5, %v92
    %v94 = vmul.f32 %v89, %v93
    %vm95 = vweird.f32 %v78
    %vm96 = vweird.f32 %v89
    %vm97 = vmor %vm95, %vm96
    %v98 = vsel %vm97, %v89, %v94
    %v99 = vmul.f32 %v75, %v88
    %v100 = vmul.f32 %v76, %v98
    %v101 = vld [vmem:[#allocation7] sm:$0xff]
    %v102 = vadd.f32 %v99, %v100
    %v103 = vadd.f32 %v101, %v102
    %104 = vst [vmem:[#allocation7] sm:$0xff] %v103
    // Predicated region
    $region22: #{tpu_custom_call.1} parent=1 // pred_check
      _
    $region23: #{tpu_custom_call.1} parent=1 // pred_check_branch
      %106 = sbr.rel (0) target = $region25
    $region24: #{tpu_custom_call.1} parent=1 // pred_region
      %108 = vsyncadd [#allocation4], 0
      %s110 = sshll.u32 [#allocation7], 4
      %s111 = int_to_ptr.vmem [resolvable:$true] %s110
      %s112 = sshll.u32 %s2, 4
      %s113 = int_to_ptr.hbm [resolvable:$true] %s112
      %115 = dma.vmem_to_hbm [thread:$0]  %s111, 128, %s113, [#allocation4]
    $region25: #{tpu_custom_call.1} parent=1 // pred_fallthru
      _
    // Predicated region
    $region26: #{tpu_custom_call.1} parent=1 // pred_check
      _
    $region27: #{tpu_custom_call.1} parent=1 // pred_check_branch
      %117 = sbr.rel (0) target = $region29
    $region28: #{tpu_custom_call.1} parent=1 // pred_region
      %119 = dma.done [#allocation4], 128
    $region29: #{tpu_custom_call.1} parent=1 // pred_fallthru
      _
    %120 = vsyncpa [#allocation3], 1
    %121 = vsyncpa [#allocation6], 1
    %122 = vsyncpa [#allocation4], 1

// kernel: tpu_custom_call.1
$region0: #{tpu_custom_call.1}
  #allocation0 [shape = 'u32[]', space=smem, size = 0x4, offset = 0x4, fixed_abs, tag = 'smem constant byte address 0x4 - core index']
  #allocation1 [shape = 'u32[72,128]{1,0:T(1,128)}', space=vmem, size = 0x9000, scoped, tag = 'internal scratch']
  %s0 = inlined_call_operand.hbm [shape: f32[16,128], index: 0, kind: input, shape index: {}]
  %s1 = inlined_call_operand.hbm [shape: f32[16,128], index: 1, kind: input, shape index: {}]
  %s2 = inlined_call_operand.hbm [shape: f32[1,8,128], index: 2, kind: output, shape index: {}]
  %s3 = sld [smem:[#allocation0]]
  $region30: #{tpu_custom_call.1} parent=0
    _
  %s5 = ssub.s32 1, %s3
  %s6 = scalar_select 0, %s5, %s3
  $region1: #{tpu_custom_call.1} parent=0
    #allocation2 [shape = 'u8[8192]{0}', space=vmem, size = 0x2000, scoped, tag = 'input window, operand 0, single buffered']
    #allocation3 [shape = 's32[1]{0}', space=sflag, size = 0x4, scoped, tag = 'scoped memory for tpu_custom_call.1']
    #allocation4 [shape = 's32[1]{0}', space=sflag, size = 0x4, scoped, tag = 'scoped memory for tpu_custom_call.1']
    #allocation5 [shape = 'u8[8192]{0}', space=vmem, size = 0x2000, scoped, tag = 'input window, operand 1, single buffered']
    #allocation6 [shape = 's32[1]{0}', space=sflag, size = 0x4, scoped, tag = 'scoped memory for tpu_custom_call.1']
    #allocation7 [shape = 'u8[4096]{0}', space=vmem, size = 0x1000, scoped, tag = 'output window, operand 0, single buffered']
    %7 = vsyncpa [#allocation3], 0
    %8 = vsyncpa [#allocation6], 0
    %9 = vsyncpa [#allocation4], 0
    // Predicated region
    $region2: #{tpu_custom_call.1} parent=1 // pred_check
      _
    $region3: #{tpu_custom_call.1} parent=1 // pred_check_branch
      %11 = sbr.rel (0) target = $region5
    $region4: #{tpu_custom_call.1} parent=1 // pred_region
      %s12 = sadd.s32 0, 0
      %p13 = scmp.lt.s32.totalorder %s12, 0
      %s14 = scalar_select %p13, %s12, 0
      %s15 = smul.u32 2, %s14
      %17 = vsyncadd [#allocation3], 0
      %s18 = smul.addr %s15, 8
      %s19 = scalar_lea.hbm %s0, %s18
      %s20 = sshll.u32 %s19, 4
      %s21 = int_to_ptr.hbm [resolvable:$true] %s20
      %s22 = sshll.u32 [#allocation2], 4
      %s23 = int_to_ptr.vmem [resolvable:$true] %s22
      %28 = dma.hbm_to_vmem [thread:$0]  %s21, 256, %s23, [#allocation3], 128, 128, 8
    $region5: #{tpu_custom_call.1} parent=1 // pred_fallthru
      _
    // Predicated region
    $region6: #{tpu_custom_call.1} parent=1 // pred_check
      _
    $region7: #{tpu_custom_call.1} parent=1 // pred_check_branch
      %30 = sbr.rel (0) target = $region9
    $region8: #{tpu_custom_call.1} parent=1 // pred_region
      %s31 = sadd.s32 0, 0
      %p32 = scmp.lt.s32.totalorder %s31, 0
      %s33 = scalar_select %p32, %s31, 0
      %s34 = smul.u32 2, %s33
      %36 = vsyncadd [#allocation6], 0
      %s37 = smul.addr %s34, 8
      %s38 = scalar_lea.hbm %s1, %s37
      %s39 = sshll.u32 %s38, 4
      %s40 = int_to_ptr.hbm [resolvable:$true] %s39
      %s41 = sshll.u32 [#allocation5], 4
      %s42 = int_to_ptr.vmem [resolvable:$true] %s41
      %47 = dma.hbm_to_vmem [thread:$0]  %s40, 256, %s42, [#allocation6], 128, 128, 8
    $region9: #{tpu_custom_call.1} parent=1 // pred_fallthru
      _
    // Predicated region
    $region10: #{tpu_custom_call.1} parent=1 // pred_check
      _
    $region11: #{tpu_custom_call.1} parent=1 // pred_check_branch
      %49 = sbr.rel (0) target = $region13
    $region12: #{tpu_custom_call.1} parent=1 // pred_region
      %51 = dma.done [#allocation3], 256
    $region13: #{tpu_custom_call.1} parent=1 // pred_fallthru
      _
    // Predicated region
    $region14: #{tpu_custom_call.1} parent=1 // pred_check
      _
    $region15: #{tpu_custom_call.1} parent=1 // pred_check_branch
      %53 = sbr.rel (0) target = $region17
    $region16: #{tpu_custom_call.1} parent=1 // pred_region
      %55 = dma.done [#allocation6], 256
    $region17: #{tpu_custom_call.1} parent=1 // pred_fallthru
      _
    %s56 = sadd.s32 0, 0
    %p57 = scmp.lt.s32.totalorder %s56, 0
    %s58 = scalar_select %p57, %s56, 0
    %s59 = smul.u32 2, %s58
    %s60 = sadd.s32 0, 0
    %p61 = scmp.lt.s32.totalorder %s60, 0
    %s62 = scalar_select %p61, %s60, 0
    %s63 = smul.u32 2, %s62
    %p64 = scmp.eq.s32.totalorder 0, 0
    // Predicated region
    $region18: #{tpu_custom_call.1} parent=1 // pred_check
      %p65 = pneg %p64
    $region19: #{tpu_custom_call.1} parent=1 // pred_check_branch
      %67 = sbr.rel (%p65) target = $region21
    $region20: #{tpu_custom_call.1} parent=1 // pred_region
      %68 = vst [vmem:[#allocation7] sm:$0xff] 0.0
    $region21: #{tpu_custom_call.1} parent=1 // pred_fallthru
      _
    %v69 = vld [vmem:[#allocation2] sm:$0xff]
    %v70 = vld [vmem:[#allocation2 + $0x8] sm:$0xff]
    %v71 = vld [vmem:[#allocation5] sm:$0xff]
    %v72 = vld [vmem:[#allocation5 + $0x8] sm:$0xff]
    %v73 = vsub.f32 %v69, %v71
    %v74 = vsub.f32 %v70, %v72
    %v75 = vmul.f32 %v73, %v73
    %v76 = vmul.f32 %v74, %v74
    %v77 = vadd.f32 %v75, 1.0
    %v78 = vadd.f32 %v76, 1.0
    %v79 = vrsqrt.pop %v77
    %v80 = vmul.f32 %v79, %v77
    %v81 = vmul.f32 %v80, %v79
    %v82 = vmul.f32 0.5, %v81
    %v83 = vsub.f32 1.5, %v82
    %v84 = vmul.f32 %v79, %v83
    %vm85 = vweird.f32 %v77
    %vm86 = vweird.f32 %v79
    %vm87 = vmor %vm85, %vm86
    %v88 = vsel %vm87, %v79, %v84
    %v89 = vrsqrt.pop %v78
    %v90 = vmul.f32 %v89, %v78
    %v91 = vmul.f32 %v90, %v89
    %v92 = vmul.f32 0.5, %v91
    %v93 = vsub.f32 1.5, %v92
    %v94 = vmul.f32 %v89, %v93
    %vm95 = vweird.f32 %v78
    %vm96 = vweird.f32 %v89
    %vm97 = vmor %vm95, %vm96
    %v98 = vsel %vm97, %v89, %v94
    %v99 = vmul.f32 %v75, %v88
    %v100 = vmul.f32 %v76, %v98
    %v101 = vld [vmem:[#allocation7] sm:$0xff]
    %v102 = vadd.f32 %v99, %v100
    %v103 = vadd.f32 %v101, %v102
    %104 = vst [vmem:[#allocation7] sm:$0xff] %v103
    // Predicated region
    $region22: #{tpu_custom_call.1} parent=1 // pred_check
      _
    $region23: #{tpu_custom_call.1} parent=1 // pred_check_branch
      %106 = sbr.rel (0) target = $region25
    $region24: #{tpu_custom_call.1} parent=1 // pred_region
      %108 = vsyncadd [#allocation4], 0
      %s110 = sshll.u32 [#allocation7], 4
      %s111 = int_to_ptr.vmem [resolvable:$true] %s110
      %s112 = sshll.u32 %s2, 4
      %s113 = int_to_ptr.hbm [resolvable:$true] %s112
      %115 = dma.vmem_to_hbm [thread:$0]  %s111, 128, %s113, [#allocation4]
    $region25: #{tpu_custom_call.1} parent=1 // pred_fallthru
      _
    // Predicated region
    $region26: #{tpu_custom_call.1} parent=1 // pred_check
      _
    $region27: #{tpu_custom_call.1} parent=1 // pred_check_branch
      %117 = sbr.rel (0) target = $region29
    $region28: #{tpu_custom_call.1} parent=1 // pred_region
      %119 = dma.done [#allocation4], 128
    $region29: #{tpu_custom_call.1} parent=1 // pred_fallthru
      _
    %120 = vsyncpa [#allocation3], 1
    %121 = vsyncpa [#allocation6], 1
    %122 = vsyncpa [#allocation4], 1

</llo_original>
